<compile_context>
chip_gen: v7x
topology: tpu7x:2x2x1
jax: 0.10.0
libtpu: 0.0.40
codegen_flags: <defaults>
</compile_context>

<pallas_src>
import functools

import jax
import jax.numpy as jnp
from jax.experimental import pallas as pl
from jax.experimental.pallas import tpu as pltpu


# ---------------------------------------------------------------------------
# hardware / tiling helpers
# ---------------------------------------------------------------------------

def _vmem_limit_bytes():
    """Generation-aware scoped-VMEM limit: ~3/4 of physical per-core VMEM."""
    try:
        cap = int(pltpu.get_tpu_info().vmem_capacity_bytes)
    except Exception:
        return 48 * 1024 * 1024            # safe on every generation
    return min((cap * 3) // 4, 112 * 1024 * 1024)   # v7x: 48 MiB, v5e/v6e: 96 MiB


_VMEM_LIMIT = _vmem_limit_bytes()


def _seq_tile(t):
    """Sequence tile: whole sequence when small, 512/256/128-multiples at scale."""
    if t <= 512:
        return t
    for cand in (512, 256, 128):
        if t % cand == 0:
            return cand
    return t  # TODO(synk): irregular long t falls back to a single big tile.


def _feat_tile(n):
    """Output-feature tile: lane-dense, up to 1024 wide."""
    if n <= 1024:
        return n
    for cand in (1024, 512, 256, 128):
        if n % cand == 0:
            return cand
    return n


def _k_tile(kin):
    """Contraction tile for the fused matmul+residual+LN kernel."""
    if kin <= 512:
        return kin
    for cand in (512, 256, 128):
        if kin % cand == 0:
            return cand
    return kin


def _heads_per_block(heads, hs):
    """Group heads so one attention grid step carries >=128 feature lanes when hs < 128."""
    if hs >= 128:
        return 1
    hpb = min(heads, max(1, 128 // hs))
    while heads % hpb:
        hpb -= 1
    return max(hpb, 1)


# ---------------------------------------------------------------------------
# Pallas kernels
# ---------------------------------------------------------------------------

def _linear_kernel(x_ref, w_ref, b_ref, o_ref, *, relu):
    """y = x @ W + b (optional ReLU).  x:(1,ts,kin) bf16, W:(kin,tn) bf16, b:(1,tn) f32."""
    y = jnp.dot(x_ref[0], w_ref[...], preferred_element_type=jnp.float32) + b_ref[...]
    if relu:
        y = jnp.maximum(y, 0.0)
    o_ref[0] = y.astype(o_ref.dtype)


def _linear_res_ln_kernel(x_ref, res_ref, w_ref, b_ref, g_ref, be_ref, o_ref, acc_ref):
    """LayerNorm((x @ W + b) + residual), contraction dim tiled over grid axis 2."""
    ki = pl.program_id(2)

    @pl.when(ki == 0)
    def _init():
        acc_ref[...] = jnp.zeros_like(acc_ref)

    acc_ref[...] += jnp.dot(x_ref[0], w_ref[...], preferred_element_type=jnp.float32)

    @pl.when(ki == pl.num_programs(2) - 1)
    def _finalize():
        h = acc_ref[...] + b_ref[...] + res_ref[0].astype(jnp.float32)
        mu = jnp.mean(h, axis=-1, keepdims=True)
        var = jnp.mean((h - mu) ** 2, axis=-1, keepdims=True)
        out = (h - mu) * jax.lax.rsqrt(var + 1e-5) * g_ref[...] + be_ref[...]
        o_ref[0] = out.astype(o_ref.dtype)


def _flash_attn_kernel(q_ref, k_ref, v_ref, bias_ref, o_ref,
                       m_sc, l_sc, acc_sc, *, inv_scale, tq, tkv):
    """Causal flash attention for one (batch, head-group, q-tile).

    The whole kv range for this (batch, head-group) is resident in VMEM; kv tiles are
    streamed by an in-kernel fori_loop bounded at the causal diagonal.
    """
    qi = pl.program_id(2)

    m_sc[...] = jnp.full(m_sc.shape, -1e30, m_sc.dtype)
    l_sc[...] = jnp.zeros(l_sc.shape, l_sc.dtype)
    acc_sc[...] = jnp.zeros(acc_sc.shape, acc_sc.dtype)

    # fold 1/sqrt(hs) into q once (tq*hs muls instead of tq*tkv per kv step)
    q = (q_ref[0].astype(jnp.float32) * inv_scale).astype(q_ref.dtype)   # (hpb, tq, hs)

    def process_block(j, masked):
        start = pl.multiple_of(j * tkv, tkv)
        kk = k_ref[0, :, pl.ds(start, tkv), :]        # (hpb, tkv, hs) bf16
        vv = v_ref[0, :, pl.ds(start, tkv), :]        # (hpb, tkv, hs) bf16
        bias = bias_ref[0, j]                         # (1, tkv) f32 additive key bias

        s = jnp.einsum("hqd,hkd->hqk", q, kk,
                       preferred_element_type=jnp.float32)               # (hpb, tq, tkv)
        s = s + bias                                  # broadcast over heads & q rows
        if masked:
            # diagonal block only (tq == tkv -> local coordinates coincide with globals)
            row = jax.lax.broadcasted_iota(jnp.int32, s.shape, 1)
            col = jax.lax.broadcasted_iota(jnp.int32, s.shape, 2)
            s = jnp.where(col > row, -1e30, s)

        m_prev = m_sc[...]
        m_new = jnp.maximum(m_prev, jnp.max(s, axis=-1, keepdims=True))
        alpha = jnp.exp(m_prev - m_new)
        p = jnp.exp(s - m_new)
        l_sc[...] = alpha * l_sc[...] + jnp.sum(p, axis=-1, keepdims=True)
        acc_sc[...] = alpha * acc_sc[...] + jnp.einsum(
            "hqk,hkd->hqd", p.astype(vv.dtype), vv,
            preferred_element_type=jnp.float32)
        m_sc[...] = m_new

    def body(j, carry):
        process_block(j, masked=False)                # strictly below diagonal -> no mask
        return carry

    jax.lax.fori_loop(0, qi, body, 0)                 # never touches above-diagonal kv tiles
    process_block(qi, masked=True)                    # diagonal block (triangular mask here only)

    out = acc_sc[...] * pl.reciprocal(l_sc[...], approx=True)
    o_ref[0] = out.astype(o_ref.dtype)


# ---------------------------------------------------------------------------
# pallas_call wrappers
# ---------------------------------------------------------------------------

def pallas_linear(x, w, bias, *, relu=False, out_dtype=jnp.bfloat16):
    b, t, kin = x.shape
    n = w.shape[1]
    ts, tn = _seq_tile(t), _feat_tile(n)
    kernel = functools.partial(_linear_kernel, relu=relu)
    return pl.pallas_call(
        kernel,
        out_shape=jax.ShapeDtypeStruct((b, t, n), out_dtype),
        # feature axis outermost -> weight tile is stationary over the inner (b, seq) loop,
        # and being effectively constant there it only needs a single buffer.
        grid=(n // tn, b, t // ts),
        in_specs=[
            pl.BlockSpec((1, ts, kin), lambda ni, bi, ti: (bi, ti, 0)),
            pl.BlockSpec((kin, tn), lambda ni, bi, ti: (0, ni),
                         pipeline_mode=pl.Buffered(1)),
            pl.BlockSpec((1, tn), lambda ni, bi, ti: (0, ni),
                         pipeline_mode=pl.Buffered(1)),
        ],
        out_specs=pl.BlockSpec((1, ts, tn), lambda ni, bi, ti: (bi, ti, ni)),
        compiler_params=pltpu.CompilerParams(
            dimension_semantics=("parallel", "parallel", "parallel"),
            vmem_limit_bytes=_VMEM_LIMIT),
    )(x, w, bias)


def pallas_linear_residual_ln(x, res, w, bias, gamma, beta):
    """LayerNorm((x @ W + b) + res); contraction dim K-tiled so the weight is streamed."""
    b, t, kin = x.shape
    n = w.shape[1]
    ts = _seq_tile(t)
    tk = _k_tile(kin)
    return pl.pallas_call(
        _linear_res_ln_kernel,
        out_shape=jax.ShapeDtypeStruct((b, t, n), jnp.bfloat16),
        grid=(b, t // ts, kin // tk),
        in_specs=[
            pl.BlockSpec((1, ts, tk), lambda bi, ti, ki: (bi, ti, ki)),
            pl.BlockSpec((1, ts, n), lambda bi, ti, ki: (bi, ti, 0)),
            pl.BlockSpec((tk, n), lambda bi, ti, ki: (ki, 0)),
            pl.BlockSpec((1, n), lambda bi, ti, ki: (0, 0), pipeline_mode=pl.Buffered(1)),
            pl.BlockSpec((1, n), lambda bi, ti, ki: (0, 0), pipeline_mode=pl.Buffered(1)),
            pl.BlockSpec((1, n), lambda bi, ti, ki: (0, 0), pipeline_mode=pl.Buffered(1)),
        ],
        out_specs=pl.BlockSpec((1, ts, n), lambda bi, ti, ki: (bi, ti, 0)),
        scratch_shapes=[pltpu.VMEM((ts, n), jnp.float32)],
        compiler_params=pltpu.CompilerParams(
            dimension_semantics=("parallel", "parallel", "arbitrary"),
            vmem_limit_bytes=_VMEM_LIMIT),
    )(x, res, w, bias, gamma, beta)


def pallas_flash_attention(q, k, v, pad_bias):
    """q,k,v: (b, heads, t, hs) bf16; pad_bias: (b, 1, t) f32 additive key bias."""
    b, h, t, hs = q.shape
    tq = _seq_tile(t)
    tkv = tq
    hpb = _heads_per_block(h, hs)
    n_kv = t // tkv
    # per-kv-tile bias, kv-tile index on a leading (untiled) dim -> cheap dynamic indexing
    bias_tiled = pad_bias.reshape(b, n_kv, 1, tkv)

    kernel = functools.partial(_flash_attn_kernel,
                               inv_scale=1.0 / float(hs) ** 0.5, tq=tq, tkv=tkv)
    return pl.pallas_call(
        kernel,
        out_shape=jax.ShapeDtypeStruct((b, h, t, hs), jnp.bfloat16),
        grid=(b, h // hpb, t // tq),
        in_specs=[
            pl.BlockSpec((1, hpb, tq, hs), lambda bi, gi, qi: (bi, gi, qi, 0)),
            # K/V: whole sequence for this (batch, head-group); block index is constant
            # across the innermost q-tile axis -> DMA'd once per (batch, head-group).
            pl.BlockSpec((1, hpb, t, hs), lambda bi, gi, qi: (bi, gi, 0, 0)),
            pl.BlockSpec((1, hpb, t, hs), lambda bi, gi, qi: (bi, gi, 0, 0)),
            pl.BlockSpec((1, n_kv, 1, tkv), lambda bi, gi, qi: (bi, 0, 0, 0)),
        ],
        out_specs=pl.BlockSpec((1, hpb, tq, hs), lambda bi, gi, qi: (bi, gi, qi, 0)),
        scratch_shapes=[
            pltpu.VMEM((hpb, tq, 1), jnp.float32),   # running max m
            pltpu.VMEM((hpb, tq, 1), jnp.float32),   # running denom l
            pltpu.VMEM((hpb, tq, hs), jnp.float32),  # output accumulator
        ],
        compiler_params=pltpu.CompilerParams(
            dimension_semantics=("parallel", "parallel", "parallel"),
            vmem_limit_bytes=_VMEM_LIMIT),
    )(q, k, v, bias_tiled)


# ---------------------------------------------------------------------------
# Model
# ---------------------------------------------------------------------------

class GTransformerPallas:
    def __init__(self, k, heads, depth, seq_length, num_tokens, key):
        assert k % heads == 0
        self.k, self.heads, self.depth = k, heads, depth
        self.num_tokens = num_tokens

        def nrm(key, shape, scale=0.05, dtype=jnp.float32):
            return (scale * jax.random.normal(key, shape, jnp.float32)).astype(dtype)

        keys = jax.random.split(key, 4 + 9 * depth)
        it = iter(keys)

        self.token_emb = nrm(next(it), (num_tokens, k), 1.0)
        self.pos_emb = nrm(next(it), (seq_length, k), 1.0)

        self.blocks = []
        for _ in range(depth):
            wq = nrm(next(it), (k, k))
            wk = nrm(next(it), (k, k))
            wv = nrm(next(it), (k, k))
            blk = {
                "wqkv": jnp.concatenate([wq, wk, wv], axis=1).astype(jnp.bfloat16),
                "wu": nrm(next(it), (k, k), dtype=jnp.bfloat16),
                "bu": nrm(next(it), (1, k)),
                "ln1_g": jnp.ones((1, k), jnp.float32),
                "ln1_b": jnp.zeros((1, k), jnp.float32),
                "ff_w1": nrm(next(it), (k, 4 * k), dtype=jnp.bfloat16),
                "ff_b1": nrm(next(it), (1, 4 * k)),
                "ff_w2": nrm(next(it), (4 * k, k), dtype=jnp.bfloat16),
                "ff_b2": nrm(next(it), (1, k)),
                "ln2_g": jnp.ones((1, k), jnp.float32),
                "ln2_b": jnp.zeros((1, k), jnp.float32),
            }
            self.blocks.append(blk)

        self.wp = nrm(next(it), (k, num_tokens), dtype=jnp.bfloat16)
        self.bp = nrm(next(it), (1, num_tokens))
        self._qkv_zero_bias = jnp.zeros((1, 3 * k), jnp.float32)

    def __call__(self, x, padding=None):
        b, t = x.shape
        k, heads = self.k, self.heads
        hs = k // heads

        # Embedding gathers + positional add stay as XLA glue (no clean Pallas gather win).
        tokens = self.token_emb[x]                                    # (b, t, k) f32
        h = (tokens + self.pos_emb[:t][None]).astype(jnp.bfloat16)    # (b, t, k) bf16

        # One additive padding bias (0 / -1e30, finite -> no NaNs), shared by every layer.
        if padding is None:
            pad_bias = jnp.zeros((b, 1, t), jnp.float32)
        else:
            pad_bias = jnp.where(padding == 0, -1e30, 0.0).astype(jnp.float32).reshape(b, 1, t)

        for p in self.blocks:
            # fused Q/K/V projection (no bias in the PyTorch module)
            qkv = pallas_linear(h, p["wqkv"], self._qkv_zero_bias)    # (b, t, 3k) bf16
            # TODO(synk): head split/merge still uses XLA relayouts; a packed head-group
            # projection output layout would remove these four per-layer transposes.
            qkv4 = qkv.reshape(b, t, 3, heads, hs).transpose(2, 0, 3, 1, 4)  # (3,b,h,t,hs)

            attn = pallas_flash_attention(qkv4[0], qkv4[1], qkv4[2], pad_bias)
            attn = attn.transpose(0, 2, 1, 3).reshape(b, t, k)        # (b, t, k) bf16

            # unifyHeads + residual + LayerNorm1
            h1 = pallas_linear_residual_ln(attn, h, p["wu"], p["bu"],
                                           p["ln1_g"], p["ln1_b"])
            # feed-forward (ReLU) + residual + LayerNorm2
            ff = pallas_linear(h1, p["ff_w1"], p["ff_b1"], relu=True)  # (b, t, 4k) bf16
            h = pallas_linear_residual_ln(ff, h1, p["ff_w2"], p["ff_b2"],
                                          p["ln2_g"], p["ln2_b"])

        # vocab projection (tiled over vocab dim at real sizes), f32 logits out
        return pallas_linear(h, self.wp, self.bp, out_dtype=jnp.float32)


# ---------------------------------------------------------------------------
# Pure-JAX reference (emulates the kernels' bf16 storage points) for correctness
# ---------------------------------------------------------------------------

def reference_forward(model, x, padding=None):
    f32 = jnp.float32

    def bf(a):  # emulate bf16 storage round-trip
        return a.astype(jnp.bfloat16).astype(f32)

    b, t = x.shape
    k, heads = model.k, model.heads
    hs = k // heads
    inv_scale = 1.0 / float(hs) ** 0.5

    h = bf(model.token_emb[x] + model.pos_emb[:t][None])
    if padding is None:
        bias = jnp.zeros((b, 1, 1, t), f32)
    else:
        bias = jnp.where(padding == 0, -1e30, 0.0).astype(f32)[:, None, None, :]
    causal = jnp.triu(jnp.ones((t, t), bool), 1)

    for p in model.blocks:
        qkv = bf(h @ p["wqkv"].astype(f32))
        q, kk, v = qkv[..., :k], qkv[..., k:2 * k], qkv[..., 2 * k:]
        q = q.reshape(b, t, heads, hs).transpose(0, 2, 1, 3)
        kk = kk.reshape(b, t, heads, hs).transpose(0, 2, 1, 3)
        v = v.reshape(b, t, heads, hs).transpose(0, 2, 1, 3)
        q = bf(q * inv_scale)                       # kernel folds the scale into q (bf16)
        s = jnp.einsum("bhqd,bhkd->bhqk", q, kk) + bias
        s = jnp.where(causal[None, None], -1e30, s)
        w = jax.nn.softmax(s, axis=-1)
        attn = bf(jnp.einsum("bhqk,bhkd->bhqd", w, v))
        attn = attn.transpose(0, 2, 1, 3).reshape(b, t, k)

        y = attn @ p["wu"].astype(f32) + p["bu"]
        h1 = y + h
        mu = h1.mean(-1, keepdims=True)
        var = ((h1 - mu) ** 2).mean(-1, keepdims=True)
        h1 = bf((h1 - mu) * jax.lax.rsqrt(var + 1e-5) * p["ln1_g"] + p["ln1_b"])

        ff = bf(jnp.maximum(h1 @ p["ff_w1"].astype(f32) + p["ff_b1"], 0.0))
        y2 = ff @ p["ff_w2"].astype(f32) + p["ff_b2"]
        h2 = y2 + h1
        mu2 = h2.mean(-1, keepdims=True)
        var2 = ((h2 - mu2) ** 2).mean(-1, keepdims=True)
        h = bf((h2 - mu2) * jax.lax.rsqrt(var2 + 1e-5) * p["ln2_g"] + p["ln2_b"])

    return h @ model.wp.astype(f32) + model.bp


# ---------------------------------------------------------------------------

if __name__ == "__main__":
    # small shapes consistent with the module's forward
    B, T, K, HEADS, DEPTH, NUM_TOKENS, SEQ_LEN = 2, 8, 32, 4, 2, 16, 8

    key = jax.random.PRNGKey(0)
    k_model, k_inp = jax.random.split(key)

    model = GTransformerPallas(K, HEADS, DEPTH, SEQ_LEN, NUM_TOKENS, k_model)
    x = jax.random.randint(k_inp, (B, T), 0, NUM_TOKENS, jnp.int32)

    # no padding (same semantics as padding=None in the PyTorch module)
    out = jax.block_until_ready(model(x, padding=None))
    ref = reference_forward(model, x, padding=None)
    assert out.shape == (B, T, NUM_TOKENS)
    assert bool(jnp.isfinite(out).all())
    assert jnp.allclose(out, ref, atol=1e-2, rtol=1e-2), "mismatch vs reference (no padding)"

    # with trailing padding (exercises the key-mask path; no fully-masked rows -> no NaNs)
    padding = jnp.ones((B, T), jnp.float32).at[:, T - 2:].set(0.0)
    out_p = jax.block_until_ready(model(x, padding=padding))
    ref_p = reference_forward(model, x, padding=padding)
    assert jnp.allclose(out_p, ref_p, atol=1e-2, rtol=1e-2), "mismatch vs reference (padding)"

    print("KERNEL_OK")
</pallas_src>

<mosaic_0001>
module attributes {stable_mosaic.version = 11 : i64} {
  func.func @_linear_kernel(%arg0: i32, %arg1: i32, %arg2: i32, %arg3: memref<1x8x32xbf16, #tpu.memory_space<vmem>>, %arg4: memref<32x96xbf16, #tpu.memory_space<vmem>>, %arg5: memref<1x96xf32, #tpu.memory_space<vmem>>, %arg6: memref<1x8x96xbf16, #tpu.memory_space<vmem>>) attributes {dimension_semantics = [#tpu.dimension_semantics<parallel>, #tpu.dimension_semantics<parallel>, #tpu.dimension_semantics<parallel>], iteration_bounds = array<i64: 1, 2, 1>, scalar_prefetch = 0 : i64, scratch_operands = 0 : i64, tpu.core_type = #tpu.core_type<tc>, window_params = [{transform_indices = @transform_0, window_bounds = array<i64: 1, 8, 32>}, {pipeline_mode = #tpu.pipeline_mode<synchronous>, transform_indices = @transform_1, window_bounds = array<i64: 32, 96>}, {pipeline_mode = #tpu.pipeline_mode<synchronous>, transform_indices = @transform_2, window_bounds = array<i64: 1, 96>}, {transform_indices = @transform_3, window_bounds = array<i64: 1, 8, 96>}]} {
    %c0 = arith.constant 0 : index
    %c0_0 = arith.constant 0 : index
    %c0_1 = arith.constant 0 : index
    %0 = vector.load %arg3[%c0, %c0_0, %c0_1] : memref<1x8x32xbf16, #tpu.memory_space<vmem>>, vector<1x8x32xbf16>
    %1 = vector.shape_cast %0 : vector<1x8x32xbf16> to vector<8x32xbf16>
    %c0_2 = arith.constant 0 : index
    %c0_3 = arith.constant 0 : index
    %2 = vector.load %arg4[%c0_2, %c0_3] : memref<32x96xbf16, #tpu.memory_space<vmem>>, vector<32x96xbf16>
    %cst = arith.constant dense<0.000000e+00> : vector<8x96xf32>
    %3 = tpu.matmul %1, %2, %cst {dimension_numbers = #tpu.dot_dimension_numbers<[1], [0], [0], [1], [0, 0, 1, 1], [], []>} : vector<8x32xbf16>, vector<32x96xbf16>, vector<8x96xf32> -> vector<8x96xf32>
    %c0_4 = arith.constant 0 : index
    %c0_5 = arith.constant 0 : index
    %4 = vector.load %arg5[%c0_4, %c0_5] : memref<1x96xf32, #tpu.memory_space<vmem>>, vector<1x96xf32>
    %5 = vector.broadcast %4 : vector<1x96xf32> to vector<8x96xf32>
    %6 = arith.addf %3, %5 : vector<8x96xf32>
    %7 = arith.truncf %6 : vector<8x96xf32> to vector<8x96xbf16>
    %c0_6 = arith.constant 0 : index
    %c0_7 = arith.constant 0 : index
    %c0_8 = arith.constant 0 : index
    %8 = vector.load %arg6[%c0_6, %c0_7, %c0_8] : memref<1x8x96xbf16, #tpu.memory_space<vmem>>, vector<1x8x96xbf16>
    %9 = vector.shape_cast %8 : vector<1x8x96xbf16> to vector<8x96xbf16>
    %10 = vector.shape_cast %7 : vector<8x96xbf16> to vector<1x8x96xbf16>
    tpu.vector_store %arg6[%c0_6, %c0_7, %c0_8], %10 {strides = array<i32>} : memref<1x8x96xbf16, #tpu.memory_space<vmem>>, vector<1x8x96xbf16>,
    return
  }
  func.func @transform_0(%arg0: i32, %arg1: i32, %arg2: i32) -> (i32, i32, i32) {
    %c0_i32 = arith.constant 0 : i32
    %c0_i32_0 = arith.constant 0 : i32
    return %arg1, %arg2, %c0_i32 : i32, i32, i32
  }
  func.func @transform_1(%arg0: i32, %arg1: i32, %arg2: i32) -> (i32, i32) {
    %c0_i32 = arith.constant 0 : i32
    %c0_i32_0 = arith.constant 0 : i32
    return %c0_i32, %arg0 : i32, i32
  }
  func.func @transform_2(%arg0: i32, %arg1: i32, %arg2: i32) -> (i32, i32) {
    %c0_i32 = arith.constant 0 : i32
    %c0_i32_0 = arith.constant 0 : i32
    return %c0_i32, %arg0 : i32, i32
  }
  func.func @transform_3(%arg0: i32, %arg1: i32, %arg2: i32) -> (i32, i32, i32) {
    %c0_i32 = arith.constant 0 : i32
    return %arg1, %arg2, %arg0 : i32, i32, i32
  }
}

</mosaic_0001>

<llo_original>
// kernel: tpu_custom_call.1
$region0: #{tpu_custom_call.1}
  #allocation0 [shape = 'u32[]', space=smem, size = 0x4, offset = 0x4, fixed_abs, tag = 'smem constant byte address 0x4 - core index']
  #allocation1 [shape = 'u32[144,128]{1,0:T(1,128)}', space=vmem, size = 0x12000, scoped, tag = 'internal scratch']
  %s0 = inlined_call_operand.hbm [shape: bf16[2,8,32], index: 0, kind: input, shape index: {}]
  %s1 = inlined_call_operand.hbm [shape: bf16[32,96], index: 1, kind: input, shape index: {}]
  %s2 = inlined_call_operand.vmem [shape: f32[1,96], index: 2, kind: input, shape index: {}]
  %s3 = inlined_call_operand.hbm [shape: bf16[2,8,96], index: 3, kind: output, shape index: {}]
  %s4 = sld [smem:[#allocation0]]
  $region53: #{tpu_custom_call.1} parent=0
    _
  %s6 = ssub.s32 1, %s4
  %s7 = scalar_select 0, %s6, %s4
  $region1: #{tpu_custom_call.1} parent=0
    #allocation2 [shape = 'u8[4096]{0}', space=vmem, size = 0x1000, scoped, tag = 'input window, operand 0']
    #allocation3 [shape = 's32[2]{0}', space=sflag, size = 0x8, scoped, tag = 'scoped memory for tpu_custom_call.1']
    #allocation4 [shape = 's32[2]{0}', space=sflag, size = 0x8, scoped, tag = 'scoped memory for tpu_custom_call.1']
    #allocation5 [shape = 'u8[8192]{0}', space=vmem, size = 0x2000, scoped, tag = 'input window, operand 1, single buffered']
    #allocation6 [shape = 's32[1]{0}', space=sflag, size = 0x4, scoped, tag = 'scoped memory for tpu_custom_call.1']
    #allocation7 [shape = 'u8[4096]{0}', space=vmem, size = 0x1000, scoped, tag = 'output window, operand 0']
    %8 = vsyncpa [#allocation3], 0
    %s9 = scalar_lea.sflag [#allocation3], 1
    %10 = vsyncpa %s9, 0
    %11 = vsyncpa [#allocation6], 0
    %12 = vsyncpa [#allocation4], 0
    %s13 = scalar_lea.sflag [#allocation4], 1
    %14 = vsyncpa %s13, 0
    loop: start=0, step=1, limit=4
    $region2: #{tpu_custom_call.1} parent=1 // loop_pre_header
      _
    $region3: #{tpu_custom_call.1} parent=1 // loop_header
      %s16 = sphi 0, %s20
      %p17 = scmp.ge.s32.totalorder %s16, 4
      %s23 = sphi 0, %s42
      %s24 = sphi 0, %s38
      %s25 = sphi 0, %s34
      %s26 = sphi 0, %s23
      %s27 = sphi 0, %s24
      %s28 = sphi 0, %s25
      %s29 = sphi 0, %s26
      %s30 = sphi 0, %s27
      %s31 = sphi 0, %s28
      %s47 = sphi 0, %s49
      %s50 = sphi 0, %s47
      %s51 = sphi 0, %s50
      %s67 = sphi 0, %s51
      %s73 = sphi 0, %s75
      %s76 = sphi 0, %s73
      %s77 = sphi 0, %s76
      %s93 = sphi 0, %s77
      %s99 = sphi 0, %s101
      %s102 = sphi 0, %s99
      %s103 = sphi 0, %s102
      %s119 = sphi 0, %s103
      %s129 = sphi 0, %s131
      %s132 = sphi 0, %s129
      %s133 = sphi 0, %s132
      %s149 = sphi 0, %s133
    $region4: #{tpu_custom_call.1} parent=1 // loop_header_branch
      %19 = sbr.rel (%p17) target = $region8
    $region5: #{tpu_custom_call.1} parent=1 // loop_body
      %s21 = ssub.s32 %s16, 1
      %s22 = ssub.s32 %s16, 2
      %s32 = sadd.s32 1, %s25
      %p33 = scmp.ge.s32.totalorder %s32, 1
      %s34 = scalar_select %p33, 0, %s32
      %s35 = sadd.s32 1, %s24
      %s36 = scalar_select %p33, %s35, %s24
      %p37 = scmp.ge.s32.totalorder %s36, 2
      %s38 = scalar_select %p37, 0, %s36
      %s39 = sadd.s32 1, %s23
      %s40 = scalar_select %p37, %s39, %s23
      %p41 = scmp.ge.s32.totalorder %s40, 1
      %s42 = scalar_select %p41, 0, %s40
      %s43 = ssub.s32 %s24, %s38
      %s44 = ssub.s32 %s25, %s34
      %s45 = sor.u32 %s43, %s44
      %p46 = scmp.eq.s32.totalorder %s45, 0
      %s48 = sadd.s32 %s47, 1
      %s49 = scalar_select %p46, %s47, %s48
      %p52 = pneg %p46
      %p53 = scmp.eq.s32.totalorder %s16, 1
      %p54 = por %p52, %p53
      %p55 = scmp.ne.s32.totalorder %s47, %s50
      %p56 = scmp.eq.s32.totalorder %s16, 0
      %p57 = por %p55, %p56
      %p58 = scmp.ne.s32.totalorder %s47, %s50
      %p59 = scmp.eq.s32.totalorder %s21, 1
      %p60 = por %p58, %p59
      %p61 = scmp.ne.s32.totalorder %s50, %s51
      %p62 = scmp.eq.s32.totalorder %s21, 0
      %p63 = por %p61, %p62
      %p64 = scmp.ne.s32.totalorder %s50, %s51
      %p65 = scmp.eq.s32.totalorder %s22, 1
      %p66 = por %p64, %p65
      %p68 = scmp.ne.s32.totalorder %s51, %s67
      %p69 = scmp.eq.s32.totalorder %s22, 0
      %p70 = por %p68, %p69
      %s71 = ssub.s32 %s23, %s42
      %p72 = scmp.eq.s32.totalorder %s71, 0
      %s74 = sadd.s32 %s73, 1
      %s75 = scalar_select %p72, %s73, %s74
      %p78 = pneg %p72
      %p79 = scmp.eq.s32.totalorder %s16, 1
      %p80 = por %p78, %p79
      %p81 = scmp.ne.s32.totalorder %s73, %s76
      %p82 = scmp.eq.s32.totalorder %s16, 0
      %p83 = por %p81, %p82
      %p84 = scmp.ne.s32.totalorder %s73, %s76
      %p85 = scmp.eq.s32.totalorder %s21, 1
      %p86 = por %p84, %p85
      %p87 = scmp.ne.s32.totalorder %s76, %s77
      %p88 = scmp.eq.s32.totalorder %s21, 0
      %p89 = por %p87, %p88
      %p90 = scmp.ne.s32.totalorder %s76, %s77
      %p91 = scmp.eq.s32.totalorder %s22, 1
      %p92 = por %p90, %p91
      %p94 = scmp.ne.s32.totalorder %s77, %s93
      %p95 = scmp.eq.s32.totalorder %s22, 0
      %p96 = por %p94, %p95
      %s97 = ssub.s32 %s23, %s42
      %p98 = scmp.eq.s32.totalorder %s97, 0
      %s100 = sadd.s32 %s99, 1
      %s101 = scalar_select %p98, %s99, %s100
      %p104 = pneg %p98
      %p105 = scmp.eq.s32.totalorder %s16, 1
      %p106 = por %p104, %p105
      %p107 = scmp.ne.s32.totalorder %s99, %s102
      %p108 = scmp.eq.s32.totalorder %s16, 0
      %p109 = por %p107, %p108
      %p110 = scmp.ne.s32.totalorder %s99, %s102
      %p111 = scmp.eq.s32.totalorder %s21, 1
      %p112 = por %p110, %p111
      %p113 = scmp.ne.s32.totalorder %s102, %s103
      %p114 = scmp.eq.s32.totalorder %s21, 0
      %p115 = por %p113, %p114
      %p116 = scmp.ne.s32.totalorder %s102, %s103
      %p117 = scmp.eq.s32.totalorder %s22, 1
      %p118 = por %p116, %p117
      %p120 = scmp.ne.s32.totalorder %s103, %s119
      %p121 = scmp.eq.s32.totalorder %s22, 0
      %p122 = por %p120, %p121
      %s123 = ssub.s32 %s24, %s38
      %s124 = ssub.s32 %s25, %s34
      %s125 = sor.u32 %s123, %s124
      %s126 = ssub.s32 %s23, %s42
      %s127 = sor.u32 %s125, %s126
      %p128 = scmp.eq.s32.totalorder %s127, 0
      %s130 = sadd.s32 %s129, 1
      %s131 = scalar_select %p128, %s129, %s130
      %p134 = pneg %p128
      %p135 = scmp.eq.s32.totalorder %s16, 1
      %p136 = por %p134, %p135
      %p137 = scmp.ne.s32.totalorder %s129, %s132
      %p138 = scmp.eq.s32.totalorder %s16, 0
      %p139 = por %p137, %p138
      %p140 = scmp.ne.s32.totalorder %s129, %s132
      %p141 = scmp.eq.s32.totalorder %s21, 1
      %p142 = por %p140, %p141
      %p143 = scmp.ne.s32.totalorder %s132, %s133
      %p144 = scmp.eq.s32.totalorder %s21, 0
      %p145 = por %p143, %p144
      %p146 = scmp.ne.s32.totalorder %s132, %s133
      %p147 = scmp.eq.s32.totalorder %s22, 1
      %p148 = por %p146, %p147
      %p150 = scmp.ne.s32.totalorder %s133, %s149
      %p151 = scmp.eq.s32.totalorder %s22, 0
      %p152 = por %p150, %p151
      %p153 = scmp.le.s32.totalorder 1, %s16
      %p154 = scmp.lt.s32.totalorder %s16, 3
      %p155 = pnand %p153, %p154
      %p156 = pneg %p155
      // Predicated region
      $region9: #{tpu_custom_call.1} parent=5 // pred_check
        _
      $region10: #{tpu_custom_call.1} parent=5 // pred_check_branch
        %158 = sbr.rel (%p155) target = $region12
      $region11: #{tpu_custom_call.1} parent=5 // pred_region
        %s159 = ssub.s32 %s16, 1
        // Predicated region
        $region13: #{tpu_custom_call.1} parent=11 // pred_check
          %p160 = pneg %p89
        $region14: #{tpu_custom_call.1} parent=11 // pred_check_branch
          %162 = sbr.rel (%p160) target = $region16
        $region15: #{tpu_custom_call.1} parent=11 // pred_region
          %s164 = ssub.s32 256, 256
          %165 = vsyncadd [#allocation6], %s164
          %s166 = smul.addr %s26, 64
          %s167 = scalar_lea.hbm %s1, %s166
          %s168 = sshll.u32 [#allocation5], 4
          %s169 = int_to_ptr.vmem [resolvable:$true] %s168
          %174 = dma.hbm_to_vmem [thread:$0]  %s167, 256, %s169, [#allocation6], 64, 64, 4
        $region16: #{tpu_custom_call.1} parent=11 // pred_fallthru
          _
        // Predicated region
        $region17: #{tpu_custom_call.1} parent=11 // pred_check
          %p175 = pneg %p115
        $region18: #{tpu_custom_call.1} parent=11 // pred_check_branch
          %177 = sbr.rel (%p175) target = $region20
        $region19: #{tpu_custom_call.1} parent=11 // pred_region
          %p178 = scmp.lt.s32.totalorder %s26, 0
          %s179 = scalar_select %p178, %s26, 0
          %s180 = scalar_lea.vmem %s2, %s179
        $region20: #{tpu_custom_call.1} parent=11 // pred_fallthru
          _
      $region12: #{tpu_custom_call.1} parent=5 // pred_fallthru
        _
      %p181 = scmp.lt.s32.totalorder %s16, 2
      // Predicated region
      $region21: #{tpu_custom_call.1} parent=5 // pred_check
        %p182 = pneg %p181
      $region22: #{tpu_custom_call.1} parent=5 // pred_check_branch
        %184 = sbr.rel (%p182) target = $region24
      $region23: #{tpu_custom_call.1} parent=5 // pred_region
        // Predicated region
        $region25: #{tpu_custom_call.1} parent=23 // pred_check
          %p185 = pneg %p57
        $region26: #{tpu_custom_call.1} parent=23 // pred_check_branch
          %187 = sbr.rel (%p185) target = $region28
        $region27: #{tpu_custom_call.1} parent=23 // pred_region
          %s188 = sand.u32 %s47, 1
          %s189 = scalar_lea.sflag [#allocation3], %s188
          %s190 = sand.u32 %s47, 1
          %s191 = smul.addr %s190, 4
          %s192 = scalar_lea.vmem [#allocation2], %s191
          %s194 = ssub.s32 64, 64
          %195 = vsyncadd %s189, %s194
          %s196 = sadd.s32 %s25, %s24
          %s197 = smul.addr %s196, 64
          %s198 = scalar_lea.hbm %s0, %s197
          %s200 = sshll.u32 %s192, 4
          %s201 = int_to_ptr.vmem [resolvable:$true] %s200
          %203 = dma.hbm_to_vmem [thread:$0]  %s198, 64, %s201, %s189
        $region28: #{tpu_custom_call.1} parent=23 // pred_fallthru
          _
      $region24: #{tpu_custom_call.1} parent=5 // pred_fallthru
        _
      %p204 = scmp.le.s32.totalorder 1, %s16
      %p205 = scmp.lt.s32.totalorder %s16, 3
      %p206 = pnand %p204, %p205
      %p207 = pneg %p206
      // Predicated region
      $region29: #{tpu_custom_call.1} parent=5 // pred_check
        _
      $region30: #{tpu_custom_call.1} parent=5 // pred_check_branch
        %209 = sbr.rel (%p206) target = $region32
      $region31: #{tpu_custom_call.1} parent=5 // pred_region
        %s210 = ssub.s32 %s16, 1
        %s211 = sand.u32 %s50, 1
        %s212 = scalar_lea.sflag [#allocation3], %s211
        %s213 = sand.u32 %s50, 1
        %s214 = smul.addr %s213, 4
        %s215 = scalar_lea.vmem [#allocation2], %s214
        // Predicated region
        $region33: #{tpu_custom_call.1} parent=31 // pred_check
          %p216 = pneg %p63
        $region34: #{tpu_custom_call.1} parent=31 // pred_check_branch
          %218 = sbr.rel (%p216) target = $region36
        $region35: #{tpu_custom_call.1} parent=31 // pred_region
          %219 = dma.done %s212, 64
        $region36: #{tpu_custom_call.1} parent=31 // pred_fallthru
          _
        // Predicated region
        $region37: #{tpu_custom_call.1} parent=31 // pred_check
          %p220 = pneg %p89
        $region38: #{tpu_custom_call.1} parent=31 // pred_check_branch
          %222 = sbr.rel (%p220) target = $region40
        $region39: #{tpu_custom_call.1} parent=31 // pred_region
          %223 = dma.done [#allocation6], 256
        $region40: #{tpu_custom_call.1} parent=31 // pred_fallthru
          _
        %s224 = sand.u32 %s50, 1
        %s225 = scalar_lea.sflag [#allocation3], %s224
        %s226 = sand.u32 %s50, 1
        %s227 = smul.addr %s226, 4
        %s228 = scalar_lea.vmem [#allocation2], %s227
        %p229 = pneg %p63
        %p230 = pneg %p60
        %p231 = pneg %p89
        %p232 = pneg %p86
        %p233 = scmp.lt.s32.totalorder %s26, 0
        %s234 = scalar_select %p233, %s26, 0
        %s235 = scalar_lea.vmem %s2, %s234
        %p236 = pneg %p115
        %p237 = pneg %p112
        %p238 = pneg %p145
        %p239 = pneg %p142
        %s240 = sand.u32 %s132, 1
        %s241 = scalar_lea.sflag [#allocation4], %s240
        %s242 = sand.u32 %s132, 1
        %s243 = smul.addr %s242, 4
        %s244 = scalar_lea.vmem [#allocation7], %s243
        %p245 = scmp.lt.s32.totalorder %s26, 0
        %s246 = scalar_select %p245, %s26, 0
        %s247 = scalar_lea.vmem %s2, %s246
        %v249 = vld [vmem:[%s215] sm:$0xf]
        %v250 = vld [vmem:[#allocation5] sm:$0xf]
        %v251 = vld [vmem:[#allocation5 + $0x4] sm:$0xf]
        %v252 = vld [vmem:[#allocation5 + $0x8] sm:$0xf]
        %v253 = vld [vmem:[#allocation5 + $0xc] sm:$0xf]
        %v254 = vld [vmem:[%s247] sm:$0x1]
        %v256 = vlaneseq
        %v257 = vshrl.u32 %v256, 7
        %v258 = vsub.s32 0, %v257
        %v259 = vrot.slane %v254, %v258
        %v265 = vunpack.c.l.b16 %v250
        %v266 = vunpack.c.l.b16 %v251
        %v267 = vunpack.c.l.b16 %v252
        %v268 = vunpack.c.l.b16 %v253
        %v269 = vpack.c.b16 %v266, %v265
        %v270 = vpack.c.b16 %v268, %v267
        %vm273 = vcmask 261120
        %v275 = vsel %vm273, %v249, 0
        %277 = vmatprep.subr.bf16.mxu0 0
        %278 = vmatpush1.bf16.msra.mxu0 %v269
        %279 = vmatprep.subr.bf16.mxu0 0
        %280 = vmatpush1.bf16.msra.mxu0 %v270
        %281 = vmatprep.subr.bf16.mxu0 0
        %282 = vmatpush1.bf16.msra.mxu0 0
        %283 = vmatprep.subr.bf16.mxu0 0
        %284 = vmatpush1.bf16.msra.mxu0 0
        %285 = vmatprep.subr.bf16.mxu0 0
        %286 = vmatpush1.bf16.msra.mxu0 0
        %287 = vmatprep.subr.bf16.mxu0 0
        %288 = vmatpush1.bf16.msra.mxu0 0
        %289 = vmatprep.subr.bf16.mxu0 0
        %290 = vmatpush1.bf16.msra.mxu0 0
        %291 = vmatprep.subr.bf16.mxu0 0
        %292 = vmatpush1.bf16.msra.mxu0 0
        %293 = vmatprep.subr.bf16.mxu0 0
        %294 = vmatpush1.bf16.msra.mxu0 0
        %295 = vmatprep.subr.bf16.mxu0 0
        %296 = vmatpush1.bf16.msra.mxu0 0
        %297 = vmatprep.subr.bf16.mxu0 0
        %298 = vmatpush1.bf16.msra.mxu0 0
        %299 = vmatprep.subr.bf16.mxu0 0
        %300 = vmatpush1.bf16.msra.mxu0 0
        %301 = vmatprep.subr.bf16.mxu0 0
        %302 = vmatpush1.bf16.msra.mxu0 0
        %303 = vmatprep.subr.bf16.mxu0 0
        %304 = vmatpush1.bf16.msra.mxu0 0
        %305 = vmatprep.subr.bf16.mxu0 0
        %306 = vmatpush1.bf16.msra.mxu0 0
        %307 = vmatprep.subr.bf16.mxu0 0
        %308 = vmatpush1.bf16.msra.mxu0 0
        %309 = vmatprep.mubr.bf16.mxu0 0
        %310 = vmatmul.mubr.bf16.gmra.mrb[0].mxu0 %v275
        %v311 = vpop.f32.mrb[0].mxu0
        %v312 = vadd.f32 %v259, %v311
        %v313 = vpop.f32.mrb[0].mxu0
        %v314 = vpop.f32.mrb[0].mxu0
        %v315 = vpop.f32.mrb[0].mxu0
        %316 = vdwg.mxu0
        %v317 = vpack.c.bf16 %v312, %v312
        %vm318 = vcmask 781312
        %319 = vst.msk [vmem:[%s244] sm:$0xf] %vm318, %v317
        %s320 = sand.u32 %s132, 1
        %s321 = scalar_lea.sflag [#allocation4], %s320
        %s322 = sand.u32 %s132, 1
        %s323 = smul.addr %s322, 4
        %s324 = scalar_lea.vmem [#allocation7], %s323
        // Predicated region
        $region41: #{tpu_custom_call.1} parent=31 // pred_check
          %p325 = pneg %p142
        $region42: #{tpu_custom_call.1} parent=31 // pred_check_branch
          %327 = sbr.rel (%p325) target = $region44
        $region43: #{tpu_custom_call.1} parent=31 // pred_region
          %s329 = ssub.s32 64, 64
          %330 = vsyncadd %s321, %s329
          %s331 = sadd.s32 %s26, %s28
          %s332 = sadd.s32 %s331, %s27
          %s333 = smul.addr %s332, 64
          %s334 = scalar_lea.hbm %s3, %s333
          %s336 = sshll.u32 %s324, 4
          %s337 = int_to_ptr.vmem [resolvable:$true] %s336
          %339 = dma.vmem_to_hbm [thread:$0]  %s337, 64, %s334, %s321
        $region44: #{tpu_custom_call.1} parent=31 // pred_fallthru
          _
      $region32: #{tpu_custom_call.1} parent=5 // pred_fallthru
        _
      %p340 = scmp.le.s32.totalorder 2, %s16
      // Predicated region
      $region45: #{tpu_custom_call.1} parent=5 // pred_check
        %p341 = pneg %p340
      $region46: #{tpu_custom_call.1} parent=5 // pred_check_branch
        %343 = sbr.rel (%p341) target = $region48
      $region47: #{tpu_custom_call.1} parent=5 // pred_region
        %s344 = ssub.s32 %s16, 2
        // Predicated region
        $region49: #{tpu_custom_call.1} parent=47 // pred_check
          %p345 = pneg %p148
        $region50: #{tpu_custom_call.1} parent=47 // pred_check_branch
          %347 = sbr.rel (%p345) target = $region52
        $region51: #{tpu_custom_call.1} parent=47 // pred_region
          %s348 = sand.u32 %s133, 1
          %s349 = scalar_lea.sflag [#allocation4], %s348
          %s350 = sand.u32 %s133, 1
          %s351 = smul.addr %s350, 4
          %s352 = scalar_lea.vmem [#allocation7], %s351
          %353 = dma.done %s349, 64
        $region52: #{tpu_custom_call.1} parent=47 // pred_fallthru
          _
      $region48: #{tpu_custom_call.1} parent=5 // pred_fallthru
        _
    $region6: #{tpu_custom_call.1} parent=1 // loop_footer
      %s20 = sadd.s32 1, %s16
    $region7: #{tpu_custom_call.1} parent=1 // loop_footer_branch
      %15 = sbr.rel target = $region3
    $region8: #{tpu_custom_call.1} parent=1 // loop_exit
      _
    %354 = vsyncpa [#allocation3], 1
    %s355 = scalar_lea.sflag [#allocation3], 1
    %356 = vsyncpa %s355, 1
    %357 = vsyncpa [#allocation6], 1
    %358 = vsyncpa [#allocation4], 1
    %s359 = scalar_lea.sflag [#allocation4], 1
    %360 = vsyncpa %s359, 1

</llo_original>
